<compile_context>
chip_gen: v5e
topology: v5e:2x2
jax: 0.10.0
libtpu: 0.0.40
codegen_flags: <defaults>
</compile_context>

<pallas_src>
import functools
import math

import jax
import jax.numpy as jnp
from jax.experimental import pallas as pl
from jax.experimental.pallas import tpu as pltpu

KERNEL_SIZE = 5
PADDING = 4
LANE = 128
SUBLANE = 8


def _cdiv(a, b):
    return -(-a // b)


def _round_up(a, b):
    return _cdiv(a, b) * b


def make_gaussian_weights_1d(kernel_size=KERNEL_SIZE):
    """1D factor of the separable Gaussian; outer(w, w) equals the PyTorch 2D kernel."""
    mean = (kernel_size - 1) / 2.0
    variance = (kernel_size / 6.0) ** 2.0
    g = [math.exp(-((i - mean) ** 2) / (2.0 * variance)) for i in range(kernel_size)]
    s = sum(g)
    return tuple(v / s for v in g)


def make_gaussian_weights_2d(kernel_size=KERNEL_SIZE):
    """2D kernel identical to the PyTorch __init__ math (used only by the reference)."""
    mean = (kernel_size - 1) / 2.0
    variance = (kernel_size / 6.0) ** 2.0
    coords = jnp.arange(kernel_size, dtype=jnp.float32)
    x_grid = jnp.tile(coords, (kernel_size, 1))
    y_grid = x_grid.T
    sq = (x_grid - mean) ** 2 + (y_grid - mean) ** 2
    g = jnp.exp(-sq / (2.0 * variance))
    return (g / jnp.sum(g)).astype(jnp.float32)


def _sym_conv_lanes(x, w, out_len):
    """5-tap (general K) conv along the last axis using symmetric tap pairing."""
    K = len(w)
    acc = None
    for k in range((K + 1) // 2):
        k2 = K - 1 - k
        a = x[:, :, k:k + out_len]
        term = w[k] * a if k2 == k else w[k] * (a + x[:, :, k2:k2 + out_len])
        acc = term if acc is None else acc + term
    return acc


def _sym_conv_rows(x, w, out_len):
    """Same, along the second-to-last (sublane) axis."""
    K = len(w)
    acc = None
    for k in range((K + 1) // 2):
        k2 = K - 1 - k
        a = x[:, k:k + out_len, :]
        term = w[k] * a if k2 == k else w[k] * (a + x[:, k2:k2 + out_len, :])
        acc = term if acc is None else acc + term
    return acc


def _gauss_sep_kernel(x_ref, o_ref, pbuf, *, w1d, pad, H, W, Ho, Wo,
                      row0, col0, Rp, Wpa):
    # x_ref: (TB, H, W)      unpadded input planes (VMEM block)
    # o_ref: (TB, Ho, Wo)    natural-width output block
    # pbuf : (TB, Rp, Wpa)   f32 staging scratch; image lives at [row0:row0+H, col0:col0+W]
    TB = x_ref.shape[0]
    f32 = jnp.float32
    Hp = H + 2 * pad

    # Zero only the halo strips (interior is fully overwritten every step).
    if row0 > 0:
        pbuf[:, 0:row0, :] = jnp.zeros((TB, row0, Wpa), f32)          # top rows
    if Rp > row0 + H:
        pbuf[:, row0 + H:Rp, :] = jnp.zeros((TB, Rp - (row0 + H), Wpa), f32)  # bottom rows
    if col0 > 0:
        pbuf[:, row0:row0 + H, 0:col0] = jnp.zeros((TB, H, col0), f32)        # left lanes
    if pad > 0:
        pbuf[:, row0:row0 + H, col0 + W:col0 + W + pad] = jnp.zeros((TB, H, pad), f32)  # right lanes

    # Stage the input, sublane-aligned at row0 (dense sublane stores), lane offset col0.
    pbuf[:, row0:row0 + H, col0:col0 + W] = x_ref[...].astype(f32)

    # Padded-image window: rows [row0-pad, row0-pad+Hp), lanes [0, W+2*pad) of pbuf.
    xr = pbuf[:, row0 - pad:row0 - pad + Hp, :]          # (TB, Hp, Wpa)

    h = _sym_conv_lanes(xr, w1d, Wo)                     # horizontal 5-tap pass
    v = _sym_conv_rows(h, w1d, Ho)                       # vertical 5-tap pass
    o_ref[...] = v.astype(o_ref.dtype)


def _tpu_info():
    """(vmem_capacity_bytes, num_tensorcores) with conservative fallbacks."""
    vmem_cap = 64 * 1024 * 1024   # conservative default (v7x per-TensorCore)
    num_cores = 1
    try:
        info = pltpu.get_tpu_info()
        cap = getattr(info, "vmem_capacity_bytes", None)
        if cap:
            vmem_cap = int(cap)
        for name in ("num_cores", "core_count", "tensorcore_count", "num_tensorcores"):
            v = getattr(info, name, None)
            if isinstance(v, int) and v > 0:
                num_cores = v
                break
    except Exception:
        pass
    return vmem_cap, num_cores


def _choose_tiling(B, per_plane_bytes, budget_bytes, min_steps):
    """Pick planes-per-step (tile_b) and grid length; no exact-divisor requirement."""
    per = max(per_plane_bytes, 1)
    max_fit = max(1, min(B, budget_bytes // per))
    want_steps = min(max(min_steps, 1), B)
    steps = max(_cdiv(B, max_fit), want_steps)
    tile_b = _cdiv(B, steps)               # balanced; tile_b <= max_fit
    return tile_b, _cdiv(B, tile_b)


def gaussian_filter(x, *, kernel_size=KERNEL_SIZE, padding=PADDING):
    """x: (N, C, H, W). Returns (N, C, H + 2p - k + 1, W + 2p - k + 1), like the Conv2d."""
    N, C, H, W = x.shape
    K, P = kernel_size, padding
    Ho = H + 2 * P - K + 1
    Wo = W + 2 * P - K + 1
    Wp = W + 2 * P

    # Staging-buffer geometry: lane width a multiple of 128; image at 8-aligned sublane
    # offset row0 (>= padding) so the interior copy is a dense sublane store.
    row0 = _round_up(P, SUBLANE) if P > 0 else 0
    col0 = P
    Rp = _round_up(row0 + H + P, SUBLANE)
    Wpa = _round_up(Wp, LANE)

    B = N * C
    xb = x.reshape(B, H, W)

    # Per-plane per-step VMEM footprint using layout-padded (8,128) tile sizes.
    itemsize = jnp.dtype(x.dtype).itemsize
    in_bytes = _round_up(H, SUBLANE) * _round_up(W, LANE) * itemsize
    out_bytes = _round_up(Ho, SUBLANE) * _round_up(Wo, LANE) * itemsize
    scratch_bytes = Rp * Wpa * 4
    per_plane = 2 * in_bytes + 2 * out_bytes + scratch_bytes   # in/out double-buffered

    vmem_cap, num_cores = _tpu_info()
    budget = vmem_cap * 45 // 100                 # block-selection budget with headroom
    min_steps = 2 * num_cores                     # >= 2 steps per TensorCore if possible
    tile_b, steps = _choose_tiling(B, per_plane, budget, min_steps)

    need = tile_b * per_plane
    vmem_limit = int(min(max(need * 3 // 2 + (4 << 20), 16 << 20),
                         vmem_cap * 85 // 100))

    w1d = make_gaussian_weights_1d(K)
    kernel = functools.partial(
        _gauss_sep_kernel, w1d=w1d, pad=P, H=H, W=W, Ho=Ho, Wo=Wo,
        row0=row0, col0=col0, Rp=Rp, Wpa=Wpa)

    out = pl.pallas_call(
        kernel,
        out_shape=jax.ShapeDtypeStruct((B, Ho, Wo), x.dtype),
        grid_spec=pltpu.PrefetchScalarGridSpec(
            num_scalar_prefetch=0,
            grid=(steps,),
            in_specs=[pl.BlockSpec((tile_b, H, W), lambda i: (i, 0, 0))],
            out_specs=pl.BlockSpec((tile_b, Ho, Wo), lambda i: (i, 0, 0)),
            scratch_shapes=[pltpu.VMEM((tile_b, Rp, Wpa), jnp.float32)],
        ),
        compiler_params=pltpu.CompilerParams(
            dimension_semantics=("parallel",),
            vmem_limit_bytes=vmem_limit,
        ),
    )(xb)

    return out.reshape(N, C, Ho, Wo)


def gaussian_filter_ref(x, *, kernel_size=KERNEL_SIZE, padding=PADDING):
    """Pure-JAX reference (lax depthwise conv) for the correctness check."""
    C = x.shape[1]
    w2d = make_gaussian_weights_2d(kernel_size)
    w = jnp.broadcast_to(w2d[None, None], (C, 1, kernel_size, kernel_size))
    return jax.lax.conv_general_dilated(
        x, w,
        window_strides=(1, 1),
        padding=[(padding, padding), (padding, padding)],
        dimension_numbers=("NCHW", "OIHW", "NCHW"),
        feature_group_count=C,
    )


if __name__ == "__main__":
    key = jax.random.PRNGKey(0)
    N, C, H, W = 2, 3, 16, 16          # module fixes C=3 (Conv2d(3, 3, ..., groups=3))
    x = jax.random.normal(key, (N, C, H, W), dtype=jnp.float32)

    out = gaussian_filter(x)
    out = jax.block_until_ready(out)

    ref = gaussian_filter_ref(x)
    assert out.shape == (N, C, H + 2 * PADDING - KERNEL_SIZE + 1,
                         W + 2 * PADDING - KERNEL_SIZE + 1)
    assert jnp.allclose(out, ref, atol=1e-5, rtol=1e-5)

    print("KERNEL_OK")
</pallas_src>

<mosaic_0001>
module attributes {stable_mosaic.version = 11 : i64} {
  func.func @_gauss_sep_kernel(%arg0: i32, %arg1: memref<3x16x16xf32, #tpu.memory_space<vmem>>, %arg2: memref<3x20x20xf32, #tpu.memory_space<vmem>>, %arg3: memref<3x32x128xf32, #tpu.memory_space<vmem>>) attributes {dimension_semantics = [#tpu.dimension_semantics<parallel>], iteration_bounds = array<i64: 2>, scalar_prefetch = 0 : i64, scratch_operands = 1 : i64, tpu.core_type = #tpu.core_type<tc>, window_params = [{transform_indices = @transform_0, window_bounds = array<i64: 3, 16, 16>}, {transform_indices = @transform_1, window_bounds = array<i64: 3, 20, 20>}]} {
    %cst = arith.constant 0.000000e+00 : f32
    %0 = vector.broadcast %cst : f32 to vector<3x8x128xf32>
    %c0 = arith.constant 0 : index
    %c0_0 = arith.constant 0 : index
    %c0_1 = arith.constant 0 : index
    %1 = vector.load %arg3[%c0, %c0_0, %c0_1] : memref<3x32x128xf32, #tpu.memory_space<vmem>>, vector<3x8x128xf32>
    tpu.vector_store %arg3[%c0, %c0_0, %c0_1], %0 {strides = array<i32>} : memref<3x32x128xf32, #tpu.memory_space<vmem>>, vector<3x8x128xf32>,
    %cst_2 = arith.constant 0.000000e+00 : f32
    %2 = vector.broadcast %cst_2 : f32 to vector<3x8x128xf32>
    %c0_3 = arith.constant 0 : index
    %c24 = arith.constant 24 : index
    %c0_4 = arith.constant 0 : index
    %3 = vector.load %arg3[%c0_3, %c24, %c0_4] : memref<3x32x128xf32, #tpu.memory_space<vmem>>, vector<3x8x128xf32>
    tpu.vector_store %arg3[%c0_3, %c24, %c0_4], %2 {strides = array<i32>} : memref<3x32x128xf32, #tpu.memory_space<vmem>>, vector<3x8x128xf32>,
    %cst_5 = arith.constant 0.000000e+00 : f32
    %4 = vector.broadcast %cst_5 : f32 to vector<3x16x4xf32>
    %c0_6 = arith.constant 0 : index
    %c8 = arith.constant 8 : index
    %c0_7 = arith.constant 0 : index
    %5 = vector.load %arg3[%c0_6, %c8, %c0_7] : memref<3x32x128xf32, #tpu.memory_space<vmem>>, vector<3x16x4xf32>
    tpu.vector_store %arg3[%c0_6, %c8, %c0_7], %4 {strides = array<i32>} : memref<3x32x128xf32, #tpu.memory_space<vmem>>, vector<3x16x4xf32>,
    %cst_8 = arith.constant 0.000000e+00 : f32
    %6 = vector.broadcast %cst_8 : f32 to vector<3x16x4xf32>
    %c0_9 = arith.constant 0 : index
    %c8_10 = arith.constant 8 : index
    %c20 = arith.constant 20 : index
    %7 = vector.load %arg3[%c0_9, %c8_10, %c20] : memref<3x32x128xf32, #tpu.memory_space<vmem>>, vector<3x16x4xf32>
    tpu.vector_store %arg3[%c0_9, %c8_10, %c20], %6 {strides = array<i32>} : memref<3x32x128xf32, #tpu.memory_space<vmem>>, vector<3x16x4xf32>,
    %c0_11 = arith.constant 0 : index
    %c0_12 = arith.constant 0 : index
    %c0_13 = arith.constant 0 : index
    %8 = vector.load %arg1[%c0_11, %c0_12, %c0_13] : memref<3x16x16xf32, #tpu.memory_space<vmem>>, vector<3x16x16xf32>
    %c0_14 = arith.constant 0 : index
    %c8_15 = arith.constant 8 : index
    %c4 = arith.constant 4 : index
    %9 = vector.load %arg3[%c0_14, %c8_15, %c4] : memref<3x32x128xf32, #tpu.memory_space<vmem>>, vector<3x16x16xf32>
    tpu.vector_store %arg3[%c0_14, %c8_15, %c4], %8 {strides = array<i32>} : memref<3x32x128xf32, #tpu.memory_space<vmem>>, vector<3x16x16xf32>,
    %c0_16 = arith.constant 0 : index
    %c4_17 = arith.constant 4 : index
    %c0_18 = arith.constant 0 : index
    %10 = vector.load %arg3[%c0_16, %c4_17, %c0_18] : memref<3x32x128xf32, #tpu.memory_space<vmem>>, vector<3x24x128xf32>
    %11 = vector.extract_strided_slice %10 {offsets = [0, 0, 0], sizes = [3, 24, 20], strides = [1, 1, 1]} : vector<3x24x128xf32> to vector<3x24x20xf32>
    %12 = vector.extract_strided_slice %10 {offsets = [0, 0, 4], sizes = [3, 24, 20], strides = [1, 1, 1]} : vector<3x24x128xf32> to vector<3x24x20xf32>
    %13 = arith.addf %11, %12 : vector<3x24x20xf32>
    %cst_19 = arith.constant 0.0269131567 : f32
    %14 = vector.broadcast %cst_19 : f32 to vector<3x24x20xf32>
    %15 = arith.mulf %14, %13 : vector<3x24x20xf32>
    %16 = vector.extract_strided_slice %10 {offsets = [0, 0, 1], sizes = [3, 24, 20], strides = [1, 1, 1]} : vector<3x24x128xf32> to vector<3x24x20xf32>
    %17 = vector.extract_strided_slice %10 {offsets = [0, 0, 3], sizes = [3, 24, 20], strides = [1, 1, 1]} : vector<3x24x128xf32> to vector<3x24x20xf32>
    %18 = arith.addf %16, %17 : vector<3x24x20xf32>
    %cst_20 = arith.constant 0.233367682 : f32
    %19 = vector.broadcast %cst_20 : f32 to vector<3x24x20xf32>
    %20 = arith.mulf %19, %18 : vector<3x24x20xf32>
    %21 = arith.addf %15, %20 : vector<3x24x20xf32>
    %22 = vector.extract_strided_slice %10 {offsets = [0, 0, 2], sizes = [3, 24, 20], strides = [1, 1, 1]} : vector<3x24x128xf32> to vector<3x24x20xf32>
    %cst_21 = arith.constant 0.479438305 : f32
    %23 = vector.broadcast %cst_21 : f32 to vector<3x24x20xf32>
    %24 = arith.mulf %23, %22 : vector<3x24x20xf32>
    %25 = arith.addf %21, %24 : vector<3x24x20xf32>
    %26 = vector.extract_strided_slice %25 {offsets = [0, 0, 0], sizes = [3, 20, 20], strides = [1, 1, 1]} : vector<3x24x20xf32> to vector<3x20x20xf32>
    %27 = vector.extract_strided_slice %25 {offsets = [0, 4, 0], sizes = [3, 20, 20], strides = [1, 1, 1]} : vector<3x24x20xf32> to vector<3x20x20xf32>
    %28 = arith.addf %26, %27 : vector<3x20x20xf32>
    %cst_22 = arith.constant 0.0269131567 : f32
    %29 = vector.broadcast %cst_22 : f32 to vector<3x20x20xf32>
    %30 = arith.mulf %29, %28 : vector<3x20x20xf32>
    %31 = vector.extract_strided_slice %25 {offsets = [0, 1, 0], sizes = [3, 20, 20], strides = [1, 1, 1]} : vector<3x24x20xf32> to vector<3x20x20xf32>
    %32 = vector.extract_strided_slice %25 {offsets = [0, 3, 0], sizes = [3, 20, 20], strides = [1, 1, 1]} : vector<3x24x20xf32> to vector<3x20x20xf32>
    %33 = arith.addf %31, %32 : vector<3x20x20xf32>
    %cst_23 = arith.constant 0.233367682 : f32
    %34 = vector.broadcast %cst_23 : f32 to vector<3x20x20xf32>
    %35 = arith.mulf %34, %33 : vector<3x20x20xf32>
    %36 = arith.addf %30, %35 : vector<3x20x20xf32>
    %37 = vector.extract_strided_slice %25 {offsets = [0, 2, 0], sizes = [3, 20, 20], strides = [1, 1, 1]} : vector<3x24x20xf32> to vector<3x20x20xf32>
    %cst_24 = arith.constant 0.479438305 : f32
    %38 = vector.broadcast %cst_24 : f32 to vector<3x20x20xf32>
    %39 = arith.mulf %38, %37 : vector<3x20x20xf32>
    %40 = arith.addf %36, %39 : vector<3x20x20xf32>
    %c0_25 = arith.constant 0 : index
    %c0_26 = arith.constant 0 : index
    %c0_27 = arith.constant 0 : index
    %41 = vector.load %arg2[%c0_25, %c0_26, %c0_27] : memref<3x20x20xf32, #tpu.memory_space<vmem>>, vector<3x20x20xf32>
    tpu.vector_store %arg2[%c0_25, %c0_26, %c0_27], %40 {strides = array<i32>} : memref<3x20x20xf32, #tpu.memory_space<vmem>>, vector<3x20x20xf32>,
    return
  }
  func.func @transform_0(%arg0: i32) -> (i32, i32, i32) {
    %c0_i32 = arith.constant 0 : i32
    %c0_i32_0 = arith.constant 0 : i32
    %c0_i32_1 = arith.constant 0 : i32
    return %arg0, %c0_i32, %c0_i32_0 : i32, i32, i32
  }
  func.func @transform_1(%arg0: i32) -> (i32, i32, i32) {
    %c0_i32 = arith.constant 0 : i32
    %c0_i32_0 = arith.constant 0 : i32
    %c0_i32_1 = arith.constant 0 : i32
    return %arg0, %c0_i32, %c0_i32_0 : i32, i32, i32
  }
}

</mosaic_0001>

<llo_original>
// kernel: tpu_custom_call.1
$region0: #{tpu_custom_call.1}
  #allocation0 [shape = 'u32[]', space=smem, size = 0x4, offset = 0x4, fixed_abs, tag = 'smem constant byte address 0x4 - core index']
  #allocation1 [shape = 'u32[72,128]{1,0:T(1,128)}', space=vmem, size = 0x9000, scoped, tag = 'internal scratch']
  #allocation2 [shape = 'f32[3,32,128]{2,1,0:T(8,128)}', space=vmem, size = 0xc000, scoped, tag = 'scratch operand']
  %s0 = inlined_call_operand.hbm [shape: f32[6,16,16], index: 0, kind: input, shape index: {}]
  %s1 = inlined_call_operand.hbm [shape: f32[6,20,20], index: 1, kind: output, shape index: {}]
  %s2 = sld [smem:[#allocation0]]
  $region41: #{tpu_custom_call.1} parent=0
    _
  %s4 = ssub.s32 1, %s2
  %s5 = scalar_select 0, %s4, %s2
  $region1: #{tpu_custom_call.1} parent=0
    #allocation3 [shape = 'u8[49152]{0}', space=vmem, size = 0xc000, scoped, tag = 'input window, operand 0']
    #allocation4 [shape = 's32[2]{0}', space=sflag, size = 0x8, scoped, tag = 'scoped memory for tpu_custom_call.1']
    #allocation5 [shape = 's32[2]{0}', space=sflag, size = 0x8, scoped, tag = 'scoped memory for tpu_custom_call.1']
    #allocation6 [shape = 'u8[73728]{0}', space=vmem, size = 0x12000, scoped, tag = 'output window, operand 0']
    %6 = vsyncpa [#allocation4], 0
    %s7 = scalar_lea.sflag [#allocation4], 1
    %8 = vsyncpa %s7, 0
    %9 = vsyncpa [#allocation5], 0
    %s10 = scalar_lea.sflag [#allocation5], 1
    %11 = vsyncpa %s10, 0
    loop: start=0, step=1, limit=4
    $region2: #{tpu_custom_call.1} parent=1 // loop_pre_header
      _
    $region3: #{tpu_custom_call.1} parent=1 // loop_header
      %s13 = sphi 0, %s17
      %p14 = scmp.ge.s32.totalorder %s13, 4
      %s23 = sphi 0, %s25
      %s26 = sphi 0, %s23
      %s27 = sphi 0, %s26
      %s43 = sphi 0, %s27
      %s49 = sphi 0, %s51
      %s52 = sphi 0, %s49
      %s53 = sphi 0, %s52
      %s69 = sphi 0, %s53
    $region4: #{tpu_custom_call.1} parent=1 // loop_header_branch
      %16 = sbr.rel (%p14) target = $region8
    $region5: #{tpu_custom_call.1} parent=1 // loop_body
      %s18 = ssub.s32 %s13, 1
      %s19 = ssub.s32 %s13, 2
      %s20 = sadd.s32 %s13, 1
      %s21 = ssub.s32 %s13, %s20
      %p22 = scmp.eq.s32.totalorder %s21, 0
      %s24 = sadd.s32 %s23, 1
      %s25 = scalar_select %p22, %s23, %s24
      %p28 = pneg %p22
      %p29 = scmp.eq.s32.totalorder %s13, 1
      %p30 = por %p28, %p29
      %p31 = scmp.ne.s32.totalorder %s23, %s26
      %p32 = scmp.eq.s32.totalorder %s13, 0
      %p33 = por %p31, %p32
      %p34 = scmp.ne.s32.totalorder %s23, %s26
      %p35 = scmp.eq.s32.totalorder %s18, 1
      %p36 = por %p34, %p35
      %p37 = scmp.ne.s32.totalorder %s26, %s27
      %p38 = scmp.eq.s32.totalorder %s18, 0
      %p39 = por %p37, %p38
      %p40 = scmp.ne.s32.totalorder %s26, %s27
      %p41 = scmp.eq.s32.totalorder %s19, 1
      %p42 = por %p40, %p41
      %p44 = scmp.ne.s32.totalorder %s27, %s43
      %p45 = scmp.eq.s32.totalorder %s19, 0
      %p46 = por %p44, %p45
      %s47 = ssub.s32 %s13, %s20
      %p48 = scmp.eq.s32.totalorder %s47, 0
      %s50 = sadd.s32 %s49, 1
      %s51 = scalar_select %p48, %s49, %s50
      %p54 = pneg %p48
      %p55 = scmp.eq.s32.totalorder %s13, 1
      %p56 = por %p54, %p55
      %p57 = scmp.ne.s32.totalorder %s49, %s52
      %p58 = scmp.eq.s32.totalorder %s13, 0
      %p59 = por %p57, %p58
      %p60 = scmp.ne.s32.totalorder %s49, %s52
      %p61 = scmp.eq.s32.totalorder %s18, 1
      %p62 = por %p60, %p61
      %p63 = scmp.ne.s32.totalorder %s52, %s53
      %p64 = scmp.eq.s32.totalorder %s18, 0
      %p65 = por %p63, %p64
      %p66 = scmp.ne.s32.totalorder %s52, %s53
      %p67 = scmp.eq.s32.totalorder %s19, 1
      %p68 = por %p66, %p67
      %p70 = scmp.ne.s32.totalorder %s53, %s69
      %p71 = scmp.eq.s32.totalorder %s19, 0
      %p72 = por %p70, %p71
      %p73 = scmp.le.s32.totalorder 1, %s13
      %p74 = scmp.lt.s32.totalorder %s13, 3
      %p75 = pnand %p73, %p74
      %p76 = pneg %p75
      // Predicated region
      $region9: #{tpu_custom_call.1} parent=5 // pred_check
        _
      $region10: #{tpu_custom_call.1} parent=5 // pred_check_branch
        %78 = sbr.rel (%p75) target = $region12
      $region11: #{tpu_custom_call.1} parent=5 // pred_region
        %s79 = ssub.s32 %s13, 1
      $region12: #{tpu_custom_call.1} parent=5 // pred_fallthru
        _
      %p80 = scmp.lt.s32.totalorder %s13, 2
      // Predicated region
      $region13: #{tpu_custom_call.1} parent=5 // pred_check
        %p81 = pneg %p80
      $region14: #{tpu_custom_call.1} parent=5 // pred_check_branch
        %83 = sbr.rel (%p81) target = $region16
      $region15: #{tpu_custom_call.1} parent=5 // pred_region
        // Predicated region
        $region17: #{tpu_custom_call.1} parent=15 // pred_check
          %p84 = pneg %p33
        $region18: #{tpu_custom_call.1} parent=15 // pred_check_branch
          %86 = sbr.rel (%p84) target = $region20
        $region19: #{tpu_custom_call.1} parent=15 // pred_region
          %s87 = sand.u32 %s23, 1
          %s88 = scalar_lea.sflag [#allocation4], %s87
          %s89 = sand.u32 %s23, 1
          %s90 = smul.addr %s89, 48
          %s91 = scalar_lea.vmem [#allocation3], %s90
          %s92 = smul.u32 3, %s13
          %94 = vsyncadd %s88, 0
          %s95 = smul.addr %s92, 2
          %s96 = smul.addr %s95, 8
          %s97 = scalar_lea.hbm %s0, %s96
          %s98 = sshll.u32 %s97, 4
          %s99 = int_to_ptr.hbm [resolvable:$true] %s98
          %s100 = sshll.u32 %s91, 4
          %s101 = int_to_ptr.vmem [resolvable:$true] %s100
          %106 = dma.hbm_to_vmem [thread:$0]  %s99, 768, %s101, %s88, 128, 128, 8
        $region20: #{tpu_custom_call.1} parent=15 // pred_fallthru
          _
      $region16: #{tpu_custom_call.1} parent=5 // pred_fallthru
        _
      %p107 = scmp.le.s32.totalorder 1, %s13
      %p108 = scmp.lt.s32.totalorder %s13, 3
      %p109 = pnand %p107, %p108
      %p110 = pneg %p109
      // Predicated region
      $region21: #{tpu_custom_call.1} parent=5 // pred_check
        _
      $region22: #{tpu_custom_call.1} parent=5 // pred_check_branch
        %112 = sbr.rel (%p109) target = $region24
      $region23: #{tpu_custom_call.1} parent=5 // pred_region
        %s113 = ssub.s32 %s13, 1
        %s114 = sand.u32 %s26, 1
        %s115 = scalar_lea.sflag [#allocation4], %s114
        %s116 = sand.u32 %s26, 1
        %s117 = smul.addr %s116, 48
        %s118 = scalar_lea.vmem [#allocation3], %s117
        // Predicated region
        $region25: #{tpu_custom_call.1} parent=23 // pred_check
          %p119 = pneg %p39
        $region26: #{tpu_custom_call.1} parent=23 // pred_check_branch
          %121 = sbr.rel (%p119) target = $region28
        $region27: #{tpu_custom_call.1} parent=23 // pred_region
          %123 = dma.done %s115, 768
        $region28: #{tpu_custom_call.1} parent=23 // pred_fallthru
          _
        %s124 = sand.u32 %s26, 1
        %s125 = scalar_lea.sflag [#allocation4], %s124
        %s126 = sand.u32 %s26, 1
        %s127 = smul.addr %s126, 48
        %s128 = scalar_lea.vmem [#allocation3], %s127
        %p129 = pneg %p39
        %p130 = pneg %p36
        %p131 = pneg %p65
        %p132 = pneg %p62
        %s133 = sand.u32 %s52, 1
        %s134 = scalar_lea.sflag [#allocation5], %s133
        %s135 = sand.u32 %s52, 1
        %s136 = smul.addr %s135, 72
        %s137 = scalar_lea.vmem [#allocation6], %s136
        %s138 = smul.u32 3, %s18
        %s139 = smul.u32 3, %s18
        %140 = vst [vmem:[#allocation2] sm:$0xff] 0.0
        %141 = vst [vmem:[#allocation2 + $0x20] sm:$0xff] 0.0
        %142 = vst [vmem:[#allocation2 + $0x40] sm:$0xff] 0.0
        %143 = vst [vmem:[#allocation2 + $0x18] sm:$0xff] 0.0
        %144 = vst [vmem:[#allocation2 + $0x38] sm:$0xff] 0.0
        %145 = vst [vmem:[#allocation2 + $0x58] sm:$0xff] 0.0
        %vm146 = vcmask 31744
        %147 = vst.msk [vmem:[#allocation2 + $0x8] sm:$0xff] %vm146, 0.0
        %148 = vst.msk [vmem:[#allocation2 + $0x10] sm:$0xff] %vm146, 0.0
        %149 = vst.msk [vmem:[#allocation2 + $0x28] sm:$0xff] %vm146, 0.0
        %150 = vst.msk [vmem:[#allocation2 + $0x30] sm:$0xff] %vm146, 0.0
        %151 = vst.msk [vmem:[#allocation2 + $0x48] sm:$0xff] %vm146, 0.0
        %152 = vst.msk [vmem:[#allocation2 + $0x50] sm:$0xff] %vm146, 0.0
        %vm153 = vcmask 195744
        %154 = vst.msk [vmem:[#allocation2 + $0x8] sm:$0xff] %vm153, 0.0
        %155 = vst.msk [vmem:[#allocation2 + $0x10] sm:$0xff] %vm153, 0.0
        %156 = vst.msk [vmem:[#allocation2 + $0x28] sm:$0xff] %vm153, 0.0
        %157 = vst.msk [vmem:[#allocation2 + $0x30] sm:$0xff] %vm153, 0.0
        %158 = vst.msk [vmem:[#allocation2 + $0x48] sm:$0xff] %vm153, 0.0
        %159 = vst.msk [vmem:[#allocation2 + $0x50] sm:$0xff] %vm153, 0.0
        %v160 = vld [vmem:[%s118] sm:$0xff]
        %v161 = vld [vmem:[%s118 + $0x8] sm:$0xff]
        %v162 = vld [vmem:[%s118 + $0x10] sm:$0xff]
        %v163 = vld [vmem:[%s118 + $0x18] sm:$0xff]
        %v164 = vld [vmem:[%s118 + $0x20] sm:$0xff]
        %v165 = vld [vmem:[%s118 + $0x28] sm:$0xff]
        %172 = vrot.lane.b32.xlu0 %v160, 4
        %v173 = vpop.permute.xlu0 %172
        %174 = vrot.lane.b32.xlu0 %v161, 4
        %v175 = vpop.permute.xlu0 %174
        %176 = vrot.lane.b32.xlu0 %v162, 4
        %v177 = vpop.permute.xlu0 %176
        %178 = vrot.lane.b32.xlu0 %v163, 4
        %v179 = vpop.permute.xlu0 %178
        %180 = vrot.lane.b32.xlu0 %v164, 4
        %v181 = vpop.permute.xlu0 %180
        %182 = vrot.lane.b32.xlu0 %v165, 4
        %v183 = vpop.permute.xlu0 %182
        %vm190 = vcmask 162848
        %191 = vst.msk [vmem:[#allocation2 + $0x8] sm:$0xff] %vm190, %v173
        %192 = vst.msk [vmem:[#allocation2 + $0x10] sm:$0xff] %vm190, %v175
        %193 = vst.msk [vmem:[#allocation2 + $0x28] sm:$0xff] %vm190, %v177
        %194 = vst.msk [vmem:[#allocation2 + $0x30] sm:$0xff] %vm190, %v179
        %195 = vst.msk [vmem:[#allocation2 + $0x48] sm:$0xff] %vm190, %v181
        %196 = vst.msk [vmem:[#allocation2 + $0x50] sm:$0xff] %vm190, %v183
        %v197 = vld [vmem:[#allocation2 + $0x4] sm:$0xff]
        %v198 = vld [vmem:[#allocation2 + $0xc] sm:$0xff]
        %v199 = vld [vmem:[#allocation2 + $0x14] sm:$0xff]
        %v200 = vld [vmem:[#allocation2 + $0x24] sm:$0xff]
        %v201 = vld [vmem:[#allocation2 + $0x2c] sm:$0xff]
        %v202 = vld [vmem:[#allocation2 + $0x34] sm:$0xff]
        %v203 = vld [vmem:[#allocation2 + $0x44] sm:$0xff]
        %v204 = vld [vmem:[#allocation2 + $0x4c] sm:$0xff]
        %v205 = vld [vmem:[#allocation2 + $0x54] sm:$0xff]
        %215 = vrot.lane.b32.xlu0 %v197, 124
        %v216 = vpop.permute.xlu0 %215
        %217 = vrot.lane.b32.xlu0 %v198, 124
        %v218 = vpop.permute.xlu0 %217
        %219 = vrot.lane.b32.xlu0 %v199, 124
        %v220 = vpop.permute.xlu0 %219
        %221 = vrot.lane.b32.xlu0 %v200, 124
        %v222 = vpop.permute.xlu0 %221
        %223 = vrot.lane.b32.xlu0 %v201, 124
        %v224 = vpop.permute.xlu0 %223
        %225 = vrot.lane.b32.xlu0 %v202, 124
        %v226 = vpop.permute.xlu0 %225
        %227 = vrot.lane.b32.xlu0 %v203, 124
        %v228 = vpop.permute.xlu0 %227
        %229 = vrot.lane.b32.xlu0 %v204, 124
        %v230 = vpop.permute.xlu0 %229
        %231 = vrot.lane.b32.xlu0 %v205, 124
        %v232 = vpop.permute.xlu0 %231
        %v242 = vadd.f32 %v197, %v216
        %v243 = vadd.f32 %v198, %v218
        %v244 = vadd.f32 %v199, %v220
        %v245 = vadd.f32 %v200, %v222
        %v246 = vadd.f32 %v201, %v224
        %v247 = vadd.f32 %v202, %v226
        %v248 = vadd.f32 %v203, %v228
        %v249 = vadd.f32 %v204, %v230
        %v250 = vadd.f32 %v205, %v232
        %v251 = vmul.f32 %v242, 0.026913157
        %v252 = vmul.f32 %v243, 0.026913157
        %v253 = vmul.f32 %v244, 0.026913157
        %v254 = vmul.f32 %v245, 0.026913157
        %v255 = vmul.f32 %v246, 0.026913157
        %v256 = vmul.f32 %v247, 0.026913157
        %v257 = vmul.f32 %v248, 0.026913157
        %v258 = vmul.f32 %v249, 0.026913157
        %v259 = vmul.f32 %v250, 0.026913157
        %260 = vrot.lane.b32.xlu0 %v197, 126
        %v261 = vpop.permute.xlu0 %260
        %262 = vrot.lane.b32.xlu0 %v198, 126
        %v263 = vpop.permute.xlu0 %262
        %264 = vrot.lane.b32.xlu0 %v199, 126
        %v265 = vpop.permute.xlu0 %264
        %266 = vrot.lane.b32.xlu0 %v200, 126
        %v267 = vpop.permute.xlu0 %266
        %268 = vrot.lane.b32.xlu0 %v201, 126
        %v269 = vpop.permute.xlu0 %268
        %270 = vrot.lane.b32.xlu0 %v202, 126
        %v271 = vpop.permute.xlu0 %270
        %272 = vrot.lane.b32.xlu0 %v203, 126
        %v273 = vpop.permute.xlu0 %272
        %274 = vrot.lane.b32.xlu0 %v204, 126
        %v275 = vpop.permute.xlu0 %274
        %276 = vrot.lane.b32.xlu0 %v205, 126
        %v277 = vpop.permute.xlu0 %276
        %v287 = vadd.f32 %v197, %v261
        %v288 = vadd.f32 %v198, %v263
        %v289 = vadd.f32 %v199, %v265
        %v290 = vadd.f32 %v200, %v267
        %v291 = vadd.f32 %v201, %v269
        %v292 = vadd.f32 %v202, %v271
        %v293 = vadd.f32 %v203, %v273
        %v294 = vadd.f32 %v204, %v275
        %v295 = vadd.f32 %v205, %v277
        %v296 = vmul.f32 %v287, 0.23336768
        %v297 = vmul.f32 %v288, 0.23336768
        %v298 = vmul.f32 %v289, 0.23336768
        %v299 = vmul.f32 %v290, 0.23336768
        %v300 = vmul.f32 %v291, 0.23336768
        %v301 = vmul.f32 %v292, 0.23336768
        %v302 = vmul.f32 %v293, 0.23336768
        %v303 = vmul.f32 %v294, 0.23336768
        %v304 = vmul.f32 %v295, 0.23336768
        %314 = vrot.lane.b32.xlu0 %v296, 127
        %v315 = vpop.permute.xlu0 %314
        %316 = vrot.lane.b32.xlu0 %v297, 127
        %v317 = vpop.permute.xlu0 %316
        %318 = vrot.lane.b32.xlu0 %v298, 127
        %v319 = vpop.permute.xlu0 %318
        %320 = vrot.lane.b32.xlu0 %v299, 127
        %v321 = vpop.permute.xlu0 %320
        %322 = vrot.lane.b32.xlu0 %v300, 127
        %v323 = vpop.permute.xlu0 %322
        %324 = vrot.lane.b32.xlu0 %v301, 127
        %v325 = vpop.permute.xlu0 %324
        %326 = vrot.lane.b32.xlu0 %v302, 127
        %v327 = vpop.permute.xlu0 %326
        %328 = vrot.lane.b32.xlu0 %v303, 127
        %v329 = vpop.permute.xlu0 %328
        %330 = vrot.lane.b32.xlu0 %v304, 127
        %v331 = vpop.permute.xlu0 %330
        %v341 = vadd.f32 %v251, %v315
        %v342 = vadd.f32 %v252, %v317
        %v343 = vadd.f32 %v253, %v319
        %v344 = vadd.f32 %v254, %v321
        %v345 = vadd.f32 %v255, %v323
        %v346 = vadd.f32 %v256, %v325
        %v347 = vadd.f32 %v257, %v327
        %v348 = vadd.f32 %v258, %v329
        %v349 = vadd.f32 %v259, %v331
        %v350 = vmul.f32 %v197, 0.4794383
        %v351 = vmul.f32 %v198, 0.4794383
        %v352 = vmul.f32 %v199, 0.4794383
        %v353 = vmul.f32 %v200, 0.4794383
        %v354 = vmul.f32 %v201, 0.4794383
        %v355 = vmul.f32 %v202, 0.4794383
        %v356 = vmul.f32 %v203, 0.4794383
        %v357 = vmul.f32 %v204, 0.4794383
        %v358 = vmul.f32 %v205, 0.4794383
        %368 = vrot.lane.b32.xlu0 %v350, 126
        %v369 = vpop.permute.xlu0 %368
        %370 = vrot.lane.b32.xlu0 %v351, 126
        %v371 = vpop.permute.xlu0 %370
        %372 = vrot.lane.b32.xlu0 %v352, 126
        %v373 = vpop.permute.xlu0 %372
        %374 = vrot.lane.b32.xlu0 %v353, 126
        %v375 = vpop.permute.xlu0 %374
        %376 = vrot.lane.b32.xlu0 %v354, 126
        %v377 = vpop.permute.xlu0 %376
        %378 = vrot.lane.b32.xlu0 %v355, 126
        %v379 = vpop.permute.xlu0 %378
        %380 = vrot.lane.b32.xlu0 %v356, 126
        %v381 = vpop.permute.xlu0 %380
        %382 = vrot.lane.b32.xlu0 %v357, 126
        %v383 = vpop.permute.xlu0 %382
        %384 = vrot.lane.b32.xlu0 %v358, 126
        %v385 = vpop.permute.xlu0 %384
        %v395 = vadd.f32 %v341, %v369
        %v396 = vadd.f32 %v342, %v371
        %v397 = vadd.f32 %v343, %v373
        %v398 = vadd.f32 %v344, %v375
        %v399 = vadd.f32 %v345, %v377
        %v400 = vadd.f32 %v346, %v379
        %v401 = vadd.f32 %v347, %v381
        %v402 = vadd.f32 %v348, %v383
        %v403 = vadd.f32 %v349, %v385
        %vm413 = vcmask 1043456
        %v414 = vrot.slane %v395, 4
        %v415 = vrot.slane %v396, 4
        %v416 = vsel %vm413, %v414, %v415
        %v417 = vrot.slane %v397, 4
        %v418 = vsel %vm413, %v415, %v417
        %v419 = vrot.slane %v398, 4
        %v420 = vrot.slane %v399, 4
        %v421 = vsel %vm413, %v419, %v420
        %v422 = vrot.slane %v400, 4
        %v423 = vsel %vm413, %v420, %v422
        %v424 = vrot.slane %v401, 4
        %v425 = vrot.slane %v402, 4
        %v426 = vsel %vm413, %v424, %v425
        %v427 = vrot.slane %v403, 4
        %v428 = vsel %vm413, %v425, %v427
        %v438 = vadd.f32 %v395, %v416
        %v439 = vadd.f32 %v396, %v418
        %v440 = vadd.f32 %v397, %v417
        %v441 = vadd.f32 %v398, %v421
        %v442 = vadd.f32 %v399, %v423
        %v443 = vadd.f32 %v400, %v422
        %v444 = vadd.f32 %v401, %v426
        %v445 = vadd.f32 %v402, %v428
        %v446 = vadd.f32 %v403, %v427
        %v447 = vmul.f32 %v438, 0.026913157
        %v448 = vmul.f32 %v439, 0.026913157
        %v449 = vmul.f32 %v440, 0.026913157
        %v450 = vmul.f32 %v441, 0.026913157
        %v451 = vmul.f32 %v442, 0.026913157
        %v452 = vmul.f32 %v443, 0.026913157
        %v453 = vmul.f32 %v444, 0.026913157
        %v454 = vmul.f32 %v445, 0.026913157
        %v455 = vmul.f32 %v446, 0.026913157
        %vm456 = vcmask 1045504
        %v457 = vrot.slane %v395, 2
        %v458 = vrot.slane %v396, 2
        %v459 = vsel %vm456, %v457, %v458
        %v460 = vrot.slane %v397, 2
        %v461 = vsel %vm456, %v458, %v460
        %v462 = vrot.slane %v398, 2
        %v463 = vrot.slane %v399, 2
        %v464 = vsel %vm456, %v462, %v463
        %v465 = vrot.slane %v400, 2
        %v466 = vsel %vm456, %v463, %v465
        %v467 = vrot.slane %v401, 2
        %v468 = vrot.slane %v402, 2
        %v469 = vsel %vm456, %v467, %v468
        %v470 = vrot.slane %v403, 2
        %v471 = vsel %vm456, %v468, %v470
        %v481 = vadd.f32 %v395, %v459
        %v482 = vadd.f32 %v396, %v461
        %v483 = vadd.f32 %v397, %v460
        %v484 = vadd.f32 %v398, %v464
        %v485 = vadd.f32 %v399, %v466
        %v486 = vadd.f32 %v400, %v465
        %v487 = vadd.f32 %v401, %v469
        %v488 = vadd.f32 %v402, %v471
        %v489 = vadd.f32 %v403, %v470
        %v490 = vmul.f32 %v481, 0.23336768
        %v491 = vmul.f32 %v482, 0.23336768
        %v492 = vmul.f32 %v483, 0.23336768
        %v493 = vmul.f32 %v484, 0.23336768
        %v494 = vmul.f32 %v485, 0.23336768
        %v495 = vmul.f32 %v486, 0.23336768
        %v496 = vmul.f32 %v487, 0.23336768
        %v497 = vmul.f32 %v488, 0.23336768
        %v498 = vmul.f32 %v489, 0.23336768
        %vm508 = vcmask 1046528
        %v509 = vrot.slane %v490, 1
        %v510 = vrot.slane %v491, 1
        %v511 = vsel %vm508, %v509, %v510
        %v512 = vrot.slane %v492, 1
        %v513 = vsel %vm508, %v510, %v512
        %v514 = vrot.slane %v493, 1
        %v515 = vrot.slane %v494, 1
        %v516 = vsel %vm508, %v514, %v515
        %v517 = vrot.slane %v495, 1
        %v518 = vsel %vm508, %v515, %v517
        %v519 = vrot.slane %v496, 1
        %v520 = vrot.slane %v497, 1
        %v521 = vsel %vm508, %v519, %v520
        %v522 = vrot.slane %v498, 1
        %v523 = vsel %vm508, %v520, %v522
        %v533 = vadd.f32 %v447, %v511
        %v534 = vadd.f32 %v448, %v513
        %v535 = vadd.f32 %v449, %v512
        %v536 = vadd.f32 %v450, %v516
        %v537 = vadd.f32 %v451, %v518
        %v538 = vadd.f32 %v452, %v517
        %v539 = vadd.f32 %v453, %v521
        %v540 = vadd.f32 %v454, %v523
        %v541 = vadd.f32 %v455, %v522
        %v542 = vmul.f32 %v395, 0.4794383
        %v543 = vmul.f32 %v396, 0.4794383
        %v544 = vmul.f32 %v397, 0.4794383
        %v545 = vmul.f32 %v398, 0.4794383
        %v546 = vmul.f32 %v399, 0.4794383
        %v547 = vmul.f32 %v400, 0.4794383
        %v548 = vmul.f32 %v401, 0.4794383
        %v549 = vmul.f32 %v402, 0.4794383
        %v550 = vmul.f32 %v403, 0.4794383
        %v560 = vrot.slane %v542, 2
        %v561 = vrot.slane %v543, 2
        %v562 = vsel %vm456, %v560, %v561
        %v563 = vrot.slane %v544, 2
        %v564 = vsel %vm456, %v561, %v563
        %v565 = vrot.slane %v545, 2
        %v566 = vrot.slane %v546, 2
        %v567 = vsel %vm456, %v565, %v566
        %v568 = vrot.slane %v547, 2
        %v569 = vsel %vm456, %v566, %v568
        %v570 = vrot.slane %v548, 2
        %v571 = vrot.slane %v549, 2
        %v572 = vsel %vm456, %v570, %v571
        %v573 = vrot.slane %v550, 2
        %v574 = vsel %vm456, %v571, %v573
        %v584 = vadd.f32 %v533, %v562
        %v585 = vadd.f32 %v534, %v564
        %v586 = vadd.f32 %v535, %v563
        %v587 = vadd.f32 %v536, %v567
        %v588 = vadd.f32 %v537, %v569
        %v589 = vadd.f32 %v538, %v568
        %v590 = vadd.f32 %v539, %v572
        %v591 = vadd.f32 %v540, %v574
        %v592 = vadd.f32 %v541, %v573
        %vm593 = vcmask 162816
        %594 = vst.msk [vmem:[%s137] sm:$0xff] %vm593, %v584
        %595 = vst.msk [vmem:[%s137 + $0x8] sm:$0xff] %vm593, %v585
        %vm596 = vcmask 158720
        %597 = vst.msk [vmem:[%s137 + $0x10] sm:$0xf] %vm596, %v586
        %598 = vst.msk [vmem:[%s137 + $0x18] sm:$0xff] %vm593, %v587
        %599 = vst.msk [vmem:[%s137 + $0x20] sm:$0xff] %vm593, %v588
        %600 = vst.msk [vmem:[%s137 + $0x28] sm:$0xf] %vm596, %v589
        %601 = vst.msk [vmem:[%s137 + $0x30] sm:$0xff] %vm593, %v590
        %602 = vst.msk [vmem:[%s137 + $0x38] sm:$0xff] %vm593, %v591
        %603 = vst.msk [vmem:[%s137 + $0x40] sm:$0xf] %vm596, %v592
        %s604 = sand.u32 %s52, 1
        %s605 = scalar_lea.sflag [#allocation5], %s604
        %s606 = sand.u32 %s52, 1
        %s607 = smul.addr %s606, 72
        %s608 = scalar_lea.vmem [#allocation6], %s607
        // Predicated region
        $region29: #{tpu_custom_call.1} parent=23 // pred_check
          %p609 = pneg %p62
        $region30: #{tpu_custom_call.1} parent=23 // pred_check_branch
          %611 = sbr.rel (%p609) target = $region32
        $region31: #{tpu_custom_call.1} parent=23 // pred_region
          %s612 = smul.u32 3, %s18
          %614 = vsyncadd %s605, 0
          %s615 = smul.addr %s612, 3
          %s616 = smul.addr %s615, 8
          %s617 = scalar_lea.hbm %s1, %s616
          %s618 = sshll.u32 %s608, 4
          %s619 = int_to_ptr.vmem [resolvable:$true] %s618
          %s620 = sshll.u32 %s617, 4
          %s621 = int_to_ptr.hbm [resolvable:$true] %s620
          %626 = dma.vmem_to_hbm [thread:$0]  %s619, 1152, %s621, %s605, 128, 128, 8
        $region32: #{tpu_custom_call.1} parent=23 // pred_fallthru
          _
      $region24: #{tpu_custom_call.1} parent=5 // pred_fallthru
        _
      %p627 = scmp.le.s32.totalorder 2, %s13
      // Predicated region
      $region33: #{tpu_custom_call.1} parent=5 // pred_check
        %p628 = pneg %p627
      $region34: #{tpu_custom_call.1} parent=5 // pred_check_branch
        %630 = sbr.rel (%p628) target = $region36
      $region35: #{tpu_custom_call.1} parent=5 // pred_region
        %s631 = ssub.s32 %s13, 2
        // Predicated region
        $region37: #{tpu_custom_call.1} parent=35 // pred_check
          %p632 = pneg %p68
        $region38: #{tpu_custom_call.1} parent=35 // pred_check_branch
          %634 = sbr.rel (%p632) target = $region40
        $region39: #{tpu_custom_call.1} parent=35 // pred_region
          %s635 = sand.u32 %s53, 1
          %s636 = scalar_lea.sflag [#allocation5], %s635
          %s637 = sand.u32 %s53, 1
          %s638 = smul.addr %s637, 72
          %s639 = scalar_lea.vmem [#allocation6], %s638
          %641 = dma.done %s636, 1152
        $region40: #{tpu_custom_call.1} parent=35 // pred_fallthru
          _
      $region36: #{tpu_custom_call.1} parent=5 // pred_fallthru
        _
    $region6: #{tpu_custom_call.1} parent=1 // loop_footer
      %s17 = sadd.s32 1, %s13
    $region7: #{tpu_custom_call.1} parent=1 // loop_footer_branch
      %12 = sbr.rel target = $region3
    $region8: #{tpu_custom_call.1} parent=1 // loop_exit
      _
    %642 = vsyncpa [#allocation4], 1
    %s643 = scalar_lea.sflag [#allocation4], 1
    %644 = vsyncpa %s643, 1
    %645 = vsyncpa [#allocation5], 1
    %s646 = scalar_lea.sflag [#allocation5], 1
    %647 = vsyncpa %s646, 1

</llo_original>
